<compile_context>
chip_gen: v6e
topology: v6e:2x2x1
jax: 0.10.0
libtpu: 0.0.40
codegen_flags: <defaults>
</compile_context>

<pallas_src>
import functools

import jax
import jax.numpy as jnp
from jax.experimental import pallas as pl
from jax.experimental.pallas import tpu as pltpu


# ---------------------------------------------------------------------------
# Fused kernel: [Linear + LeakyReLU(0.2)] * n_layers  (+ optional classifier)
# ---------------------------------------------------------------------------
def _fused_mlp_kernel(*refs, n_layers, with_clf, matmul_dtype, neg_slope=0.2):
    # refs = (x, w0, b0, w1, b1, ..., [w_clf_row, b_clf], out)
    x_ref = refs[0]
    o_ref = refs[-1]
    params = refs[1:-1]

    h = x_ref[...].astype(jnp.float32)
    for i in range(n_layers):
        w = params[2 * i][...]                             # (D_i, D_{i+1})
        b = params[2 * i + 1][...].astype(jnp.float32)     # (1,  D_{i+1})
        # bf16 x bf16 -> f32 accumulate: single pass on the bf16-native MXU.
        y = jnp.dot(h.astype(matmul_dtype), w.astype(matmul_dtype),
                    preferred_element_type=jnp.float32) + b
        h = jnp.maximum(y, neg_slope * y)                  # LeakyReLU(0.2)
        # Dropout(p=0) is the identity.
    if with_clf:
        w_row = params[-2][...].astype(jnp.float32)        # (1, H)
        b_clf = params[-1][...].astype(jnp.float32)        # (1, 1)
        # Lane-dense classifier: (1,H) @ (H,tile) -> (1,tile).  Batch lands on
        # the lane axis so the writeback is dense vst instead of tile/8
        # single-lane masked stores.  Classifier stays f32 (final output).
        s = jnp.dot(w_row, h.T, preferred_element_type=jnp.float32) + b_clf
        o_ref[...] = s.astype(o_ref.dtype)
    else:
        o_ref[...] = h.astype(o_ref.dtype)


def _collect_inputs(x, layer_params, clf_params):
    """Flatten inputs; classifier weight is passed as a (1, H) row vector."""
    inputs = [x]
    for w, b in layer_params:
        inputs += [w, b]
    if clf_params is not None:
        w_clf, b_clf = clf_params
        inputs += [w_clf.reshape(1, -1), b_clf.reshape(1, 1)]
    return inputs


def _last_hidden_dim(x, layer_params):
    return layer_params[-1][0].shape[1] if layer_params else x.shape[1]


# ---------------------------------------------------------------------------
# Small-batch path: no grid, everything fully resident in VMEM.
# ---------------------------------------------------------------------------
def _forward_resident(x, layer_params, clf_params, matmul_dtype):
    N = x.shape[0]
    with_clf = clf_params is not None
    inputs = _collect_inputs(x, layer_params, clf_params)
    if with_clf:
        out_shape = jax.ShapeDtypeStruct((1, N), x.dtype)
    else:
        out_shape = jax.ShapeDtypeStruct((N, _last_hidden_dim(x, layer_params)),
                                         x.dtype)
    kernel = functools.partial(
        _fused_mlp_kernel, n_layers=len(layer_params),
        with_clf=with_clf, matmul_dtype=matmul_dtype)
    vmem = pl.BlockSpec(memory_space=pltpu.MemorySpace.VMEM)
    out = pl.pallas_call(
        kernel,
        out_shape=out_shape,
        in_specs=[vmem] * len(inputs),
        out_specs=vmem,
    )(*inputs)
    return out.reshape(N, 1) if with_clf else out


# ---------------------------------------------------------------------------
# Large-batch path: grid over batch (ragged last block), weights resident.
# ---------------------------------------------------------------------------
def _forward_tiled(x, layer_params, clf_params, matmul_dtype, batch_tile):
    N, D = x.shape
    with_clf = clf_params is not None
    inputs = _collect_inputs(x, layer_params, clf_params)

    in_specs = [pl.BlockSpec((batch_tile, D), lambda i: (i, 0))]
    for arr in inputs[1:]:
        # Full-array blocks with a constant index_map -> fetched once, stay
        # resident in VMEM across all grid steps.
        in_specs.append(pl.BlockSpec(arr.shape, lambda i: (0, 0)))

    if with_clf:
        out_shape = jax.ShapeDtypeStruct((1, N), x.dtype)
        out_spec = pl.BlockSpec((1, batch_tile), lambda i: (0, i))
    else:
        out_dim = _last_hidden_dim(x, layer_params)
        out_shape = jax.ShapeDtypeStruct((N, out_dim), x.dtype)
        out_spec = pl.BlockSpec((batch_tile, out_dim), lambda i: (i, 0))

    kernel = functools.partial(
        _fused_mlp_kernel, n_layers=len(layer_params),
        with_clf=with_clf, matmul_dtype=matmul_dtype)
    out = pl.pallas_call(
        kernel,
        out_shape=out_shape,
        grid=(pl.cdiv(N, batch_tile),),     # no wrapper-side pad of x in HBM
        in_specs=in_specs,
        out_specs=out_spec,
        compiler_params=pltpu.CompilerParams(
            # Batch tiles are independent -> v7x megacore shards the grid
            # across its 2 TensorCores (near-no-op on single-TC v5e/v6e).
            dimension_semantics=("parallel",),
        ),
    )(*inputs)
    return out.reshape(N, 1) if with_clf else out


# Tile sizing: resident (no grid) for small batches; otherwise ~8 grid steps
# (>=4 per TensorCore on v7x), tile a multiple of 128 (lane-dense clf block),
# capped at 8192 rows (few-MiB working set, well under default scoped VMEM).
_RESIDENT_BATCH_MAX = 4096
_MAX_BATCH_TILE = 8192
_MIN_BATCH_TILE = 512
_LANE = 128


def _choose_batch_tile(n_rows):
    t = (n_rows // 8) // _LANE * _LANE
    return int(min(_MAX_BATCH_TILE, max(_MIN_BATCH_TILE, t)))


def mlp_classifier_mixup_forward(x, hidden_params, clf_params,
                                 start=0, end=None, batch_tile=None,
                                 matmul_dtype=jnp.bfloat16):
    """Pallas implementation of MLPClassifierMixup.forward.

    start/end slice the hidden layers exactly like the PyTorch module.
    Dropout has p=0 in this configuration, so it is the identity.
    """
    # TODO(synk): Dropout with p>0 (training mode) not implemented; p=0 => identity.
    layers = list(hidden_params[start:end])
    clf = clf_params if end is None else None
    if not layers and clf is None:
        # start=0, end=0 noop convention: return the input unchanged.
        return x
    N = x.shape[0]
    if batch_tile is None:
        if N <= _RESIDENT_BATCH_MAX:
            return _forward_resident(x, layers, clf, matmul_dtype)
        batch_tile = _choose_batch_tile(N)
    assert batch_tile % _LANE == 0, "batch_tile must be a multiple of 128"
    return _forward_tiled(x, layers, clf, matmul_dtype, batch_tile)


# ---------------------------------------------------------------------------
# Parameter init (matches the module's shapes) and pure-JAX reference
# ---------------------------------------------------------------------------
def init_mlp_params(key, n_features, hidden_dims):
    dims = (n_features,) + tuple(hidden_dims)
    params = []
    for i in range(len(hidden_dims)):
        key, kw, kb = jax.random.split(key, 3)
        bound = 1.0 / jnp.sqrt(dims[i])
        w = jax.random.uniform(kw, (dims[i], dims[i + 1]), jnp.float32, -bound, bound)
        b = jax.random.uniform(kb, (1, dims[i + 1]), jnp.float32, -bound, bound)
        params.append((w, b))
    key, kw, kb = jax.random.split(key, 3)
    bound = 1.0 / jnp.sqrt(dims[-1])
    w_clf = jax.random.uniform(kw, (dims[-1], 1), jnp.float32, -bound, bound)
    b_clf = jax.random.uniform(kb, (1, 1), jnp.float32, -bound, bound)
    return params, (w_clf, b_clf)


def _reference_forward(x, hidden_params, clf_params, start=0, end=None,
                       matmul_dtype=jnp.float32):
    h = x
    for (w, b) in hidden_params[start:end]:
        y = jnp.dot(h.astype(matmul_dtype), w.astype(matmul_dtype),
                    preferred_element_type=jnp.float32) + b
        h = jnp.maximum(y, 0.2 * y)
    if end is None:
        w_clf, b_clf = clf_params
        h = h @ w_clf + b_clf
    return h


if __name__ == "__main__":
    n_features = 32
    hidden_dims = (64, 32)
    bf16 = jnp.bfloat16

    key = jax.random.PRNGKey(0)
    key, kx, kxl = jax.random.split(key, 3)
    hidden_params, clf_params = init_mlp_params(key, n_features, hidden_dims)

    def ref(x, **kw):
        return _reference_forward(x, hidden_params, clf_params,
                                  matmul_dtype=bf16, **kw)

    # 1) Small batch: single fused kernel, no grid, fully VMEM-resident.
    x = jax.random.normal(kx, (8, n_features), jnp.float32)
    out = jax.block_until_ready(
        mlp_classifier_mixup_forward(x, hidden_params, clf_params))
    assert out.shape == (8, 1), out.shape
    assert jnp.allclose(out, ref(x), atol=1e-2, rtol=1e-2)
    # Sanity check against the pure-f32 reference (bf16 matmul numerics).
    ref_f32 = _reference_forward(x, hidden_params, clf_params)
    assert jnp.allclose(out, ref_f32, atol=5e-2, rtol=5e-2)

    # 2) start/end slicing (layer 0 only, then resume from layer 1 to clf).
    h1 = jax.block_until_ready(
        mlp_classifier_mixup_forward(x, hidden_params, clf_params, start=0, end=1))
    assert h1.shape == (8, hidden_dims[0])
    assert jnp.allclose(h1, ref(x, start=0, end=1), atol=1e-2, rtol=1e-2)
    out_tail = jax.block_until_ready(
        mlp_classifier_mixup_forward(h1, hidden_params, clf_params, start=1))
    assert jnp.allclose(out_tail, ref(h1, start=1), atol=1e-2, rtol=1e-2)

    # 3) Noop convention: start=0, end=0 returns x unchanged (no kernel launch).
    noop = mlp_classifier_mixup_forward(x, hidden_params, clf_params, start=0, end=0)
    assert noop.shape == x.shape and bool(jnp.all(noop == x))

    # 4) Batch-tiled path: grid over batch, weights resident, lane-dense output.
    xl = jax.random.normal(kxl, (512, n_features), jnp.float32)
    out_t = jax.block_until_ready(
        mlp_classifier_mixup_forward(xl, hidden_params, clf_params, batch_tile=128))
    assert out_t.shape == (512, 1), out_t.shape
    assert jnp.allclose(out_t, ref(xl), atol=1e-2, rtol=1e-2)

    # 5) Ragged batch (no wrapper pad): last grid block is partial and masked.
    xr = xl[:500]
    out_r = jax.block_until_ready(
        mlp_classifier_mixup_forward(xr, hidden_params, clf_params, batch_tile=128))
    assert out_r.shape == (500, 1), out_r.shape
    assert jnp.allclose(out_r, ref(xr), atol=1e-2, rtol=1e-2)

    # 6) Tiled path without the classifier (end given): row-layout output.
    out_h = jax.block_until_ready(
        mlp_classifier_mixup_forward(xl, hidden_params, clf_params,
                                     end=2, batch_tile=128))
    assert out_h.shape == (512, hidden_dims[-1]), out_h.shape
    assert jnp.allclose(out_h, ref(xl, end=2), atol=1e-2, rtol=1e-2)

    print("KERNEL_OK")
</pallas_src>

<mosaic_0001>
module attributes {stable_mosaic.version = 11 : i64} {
  func.func @_fused_mlp_kernel(%arg0: memref<8x32xf32, #tpu.memory_space<vmem>>, %arg1: memref<32x64xf32, #tpu.memory_space<vmem>>, %arg2: memref<1x64xf32, #tpu.memory_space<vmem>>, %arg3: memref<64x32xf32, #tpu.memory_space<vmem>>, %arg4: memref<1x32xf32, #tpu.memory_space<vmem>>, %arg5: memref<1x32xf32, #tpu.memory_space<vmem>>, %arg6: memref<1x1xf32, #tpu.memory_space<vmem>>, %arg7: memref<1x8xf32, #tpu.memory_space<vmem>>) attributes {dimension_semantics = [], scalar_prefetch = 0 : i64, scratch_operands = 0 : i64, tpu.core_type = #tpu.core_type<tc>} {
    %c0 = arith.constant 0 : index
    %c0_0 = arith.constant 0 : index
    %0 = vector.load %arg0[%c0, %c0_0] : memref<8x32xf32, #tpu.memory_space<vmem>>, vector<8x32xf32>
    %c0_1 = arith.constant 0 : index
    %c0_2 = arith.constant 0 : index
    %1 = vector.load %arg1[%c0_1, %c0_2] : memref<32x64xf32, #tpu.memory_space<vmem>>, vector<32x64xf32>
    %c0_3 = arith.constant 0 : index
    %c0_4 = arith.constant 0 : index
    %2 = vector.load %arg2[%c0_3, %c0_4] : memref<1x64xf32, #tpu.memory_space<vmem>>, vector<1x64xf32>
    %3 = arith.truncf %0 : vector<8x32xf32> to vector<8x32xbf16>
    %4 = arith.truncf %1 : vector<32x64xf32> to vector<32x64xbf16>
    %cst = arith.constant dense<0.000000e+00> : vector<8x64xf32>
    %5 = tpu.matmul %3, %4, %cst {dimension_numbers = #tpu.dot_dimension_numbers<[1], [0], [0], [1], [0, 0, 1, 1], [], []>} : vector<8x32xbf16>, vector<32x64xbf16>, vector<8x64xf32> -> vector<8x64xf32>
    %6 = vector.broadcast %2 : vector<1x64xf32> to vector<8x64xf32>
    %7 = arith.addf %5, %6 : vector<8x64xf32>
    %cst_5 = arith.constant 2.000000e-01 : f32
    %8 = vector.broadcast %cst_5 : f32 to vector<8x64xf32>
    %9 = arith.mulf %8, %7 : vector<8x64xf32>
    %10 = arith.maximumf %7, %9 : vector<8x64xf32>
    %c0_6 = arith.constant 0 : index
    %c0_7 = arith.constant 0 : index
    %11 = vector.load %arg3[%c0_6, %c0_7] : memref<64x32xf32, #tpu.memory_space<vmem>>, vector<64x32xf32>
    %c0_8 = arith.constant 0 : index
    %c0_9 = arith.constant 0 : index
    %12 = vector.load %arg4[%c0_8, %c0_9] : memref<1x32xf32, #tpu.memory_space<vmem>>, vector<1x32xf32>
    %13 = arith.truncf %10 : vector<8x64xf32> to vector<8x64xbf16>
    %14 = arith.truncf %11 : vector<64x32xf32> to vector<64x32xbf16>
    %cst_10 = arith.constant dense<0.000000e+00> : vector<8x32xf32>
    %15 = tpu.matmul %13, %14, %cst_10 {dimension_numbers = #tpu.dot_dimension_numbers<[1], [0], [0], [1], [0, 0, 1, 1], [], []>} : vector<8x64xbf16>, vector<64x32xbf16>, vector<8x32xf32> -> vector<8x32xf32>
    %16 = vector.broadcast %12 : vector<1x32xf32> to vector<8x32xf32>
    %17 = arith.addf %15, %16 : vector<8x32xf32>
    %cst_11 = arith.constant 2.000000e-01 : f32
    %18 = vector.broadcast %cst_11 : f32 to vector<8x32xf32>
    %19 = arith.mulf %18, %17 : vector<8x32xf32>
    %20 = arith.maximumf %17, %19 : vector<8x32xf32>
    %c0_12 = arith.constant 0 : index
    %c0_13 = arith.constant 0 : index
    %21 = vector.load %arg5[%c0_12, %c0_13] : memref<1x32xf32, #tpu.memory_space<vmem>>, vector<1x32xf32>
    %c0_14 = arith.constant 0 : index
    %c0_15 = arith.constant 0 : index
    %22 = vector.load %arg6[%c0_14, %c0_15] : memref<1x1xf32, #tpu.memory_space<vmem>>, vector<1x1xf32>
    %23 = tpu.transpose %20, [1, 0] : vector<8x32xf32> -> vector<32x8xf32>
    %cst_16 = arith.constant dense<0.000000e+00> : vector<1x8xf32>
    %24 = tpu.matmul %21, %23, %cst_16 {dimension_numbers = #tpu.dot_dimension_numbers<[1], [0], [0], [1], [0, 0, 1, 1], [], []>} : vector<1x32xf32>, vector<32x8xf32>, vector<1x8xf32> -> vector<1x8xf32>
    %25 = vector.broadcast %22 : vector<1x1xf32> to vector<1x8xf32>
    %26 = arith.addf %24, %25 : vector<1x8xf32>
    %c0_17 = arith.constant 0 : index
    %c0_18 = arith.constant 0 : index
    %27 = vector.load %arg7[%c0_17, %c0_18] : memref<1x8xf32, #tpu.memory_space<vmem>>, vector<1x8xf32>
    tpu.vector_store %arg7[%c0_17, %c0_18], %26 {strides = array<i32>} : memref<1x8xf32, #tpu.memory_space<vmem>>, vector<1x8xf32>,
    return
  }
}

</mosaic_0001>

<llo_original>
// kernel: tpu_custom_call.1
$region0: #{tpu_custom_call.1}
  #allocation0 [shape = 'u32[]', space=smem, size = 0x4, offset = 0x4, fixed_abs, tag = 'smem constant byte address 0x4 - core index']
  #allocation1 [shape = 'u32[144,128]{1,0:T(1,128)}', space=vmem, size = 0x12000, scoped, tag = 'internal scratch']
  #allocation2 [shape = 'f32[1,1]{1,0:T(1,128)S(1)}', space=vmem, size = 0x200, scoped, tag = 'scoped memory for tpu_custom_call.1']
  %s0 = inlined_call_operand.vmem [shape: f32[8,32], index: 0, kind: input, shape index: {}]
  %s1 = inlined_call_operand.vmem [shape: f32[32,64], index: 1, kind: input, shape index: {}]
  %s2 = inlined_call_operand.vmem [shape: f32[1,64], index: 2, kind: input, shape index: {}]
  %s3 = inlined_call_operand.vmem [shape: f32[64,32], index: 3, kind: input, shape index: {}]
  %s4 = inlined_call_operand.vmem [shape: f32[1,32], index: 4, kind: input, shape index: {}]
  %s5 = inlined_call_operand.vmem [shape: f32[1,32], index: 5, kind: input, shape index: {}]
  %s6 = inlined_call_operand.<no memory space> [shape: f32[1,1], index: 6, kind: input, shape index: {}]
  %s7 = inlined_call_operand.hbm [shape: f32[1,8], index: 7, kind: output, shape index: {}]
  %s8 = sld [smem:[#allocation0]]
  $region38: #{tpu_custom_call.1} parent=0
    _
  %s10 = ssub.s32 1, %s8
  %s11 = scalar_select 0, %s10, %s8
  %v12 = vstv %s6
  %13 = vst [vmem:[#allocation2] sm:$0x1] %v12
  $region1: #{tpu_custom_call.1} parent=0
    #allocation3 [shape = 'u8[512]{0}', space=vmem, size = 0x400, scoped, tag = 'output window, operand 0, single buffered']
    #allocation4 [shape = 's32[1]{0}', space=sflag, size = 0x4, scoped, tag = 'scoped memory for tpu_custom_call.1']
    %14 = vsyncpa [#allocation4], 0
    // Predicated region
    $region2: #{tpu_custom_call.1} parent=1 // pred_check
      _
    $region3: #{tpu_custom_call.1} parent=1 // pred_check_branch
      %16 = sbr.rel (0) target = $region5
    $region4: #{tpu_custom_call.1} parent=1 // pred_region
      _
    $region5: #{tpu_custom_call.1} parent=1 // pred_fallthru
      _
    // Predicated region
    $region6: #{tpu_custom_call.1} parent=1 // pred_check
      _
    $region7: #{tpu_custom_call.1} parent=1 // pred_check_branch
      %18 = sbr.rel (0) target = $region9
    $region8: #{tpu_custom_call.1} parent=1 // pred_region
      _
    $region9: #{tpu_custom_call.1} parent=1 // pred_fallthru
      _
    // Predicated region
    $region10: #{tpu_custom_call.1} parent=1 // pred_check
      _
    $region11: #{tpu_custom_call.1} parent=1 // pred_check_branch
      %20 = sbr.rel (0) target = $region13
    $region12: #{tpu_custom_call.1} parent=1 // pred_region
      _
    $region13: #{tpu_custom_call.1} parent=1 // pred_fallthru
      _
    // Predicated region
    $region14: #{tpu_custom_call.1} parent=1 // pred_check
      _
    $region15: #{tpu_custom_call.1} parent=1 // pred_check_branch
      %22 = sbr.rel (0) target = $region17
    $region16: #{tpu_custom_call.1} parent=1 // pred_region
      _
    $region17: #{tpu_custom_call.1} parent=1 // pred_fallthru
      _
    // Predicated region
    $region18: #{tpu_custom_call.1} parent=1 // pred_check
      _
    $region19: #{tpu_custom_call.1} parent=1 // pred_check_branch
      %24 = sbr.rel (0) target = $region21
    $region20: #{tpu_custom_call.1} parent=1 // pred_region
      _
    $region21: #{tpu_custom_call.1} parent=1 // pred_fallthru
      _
    // Predicated region
    $region22: #{tpu_custom_call.1} parent=1 // pred_check
      _
    $region23: #{tpu_custom_call.1} parent=1 // pred_check_branch
      %26 = sbr.rel (0) target = $region25
    $region24: #{tpu_custom_call.1} parent=1 // pred_region
      _
    $region25: #{tpu_custom_call.1} parent=1 // pred_fallthru
      _
    // Predicated region
    $region26: #{tpu_custom_call.1} parent=1 // pred_check
      _
    $region27: #{tpu_custom_call.1} parent=1 // pred_check_branch
      %28 = sbr.rel (0) target = $region29
    $region28: #{tpu_custom_call.1} parent=1 // pred_region
      _
    $region29: #{tpu_custom_call.1} parent=1 // pred_fallthru
      _
    %v30 = vld [vmem:[%s0] sm:$0xff]
    %v31 = vld [vmem:[%s1] sm:$0xff]
    %v32 = vld [vmem:[%s1 + $0x8] sm:$0xff]
    %v33 = vld [vmem:[%s1 + $0x10] sm:$0xff]
    %v34 = vld [vmem:[%s1 + $0x18] sm:$0xff]
    %v35 = vld [vmem:[%s2] sm:$0x1]
    %v36 = vpack.c.bf16 %v30, %v30
    %v37 = vpack.c.bf16 %v32, %v31
    %v38 = vpack.c.bf16 %v34, %v33
    %v40 = vlaneseq
    %v41 = vshrl.u32 %v40, 7
    %v42 = vsub.s32 0, %v41
    %v43 = vrot.slane %v35, %v42
    %vm45 = vcmask 261120
    %v47 = vsel %vm45, %v36, 0
    %49 = vmatprep.subr.bf16.mxu0 0
    %50 = vmatpush1.bf16.msra.mxu0 0
    %51 = vmatprep.subr.bf16.mxu0 0
    %52 = vmatpush1.bf16.msra.mxu0 0
    %53 = vmatprep.subr.bf16.mxu0 0
    %54 = vmatpush1.bf16.msra.mxu0 0
    %55 = vmatprep.subr.bf16.mxu0 0
    %56 = vmatpush1.bf16.msra.mxu0 0
    %57 = vmatprep.subr.bf16.mxu0 0
    %58 = vmatpush1.bf16.msra.mxu0 0
    %59 = vmatprep.subr.bf16.mxu0 0
    %60 = vmatpush1.bf16.msra.mxu0 0
    %61 = vmatprep.subr.bf16.mxu0 0
    %62 = vmatpush1.bf16.msra.mxu0 %v38
    %63 = vmatprep.subr.bf16.mxu0 0
    %64 = vmatpush1.bf16.msra.mxu0 %v37
    %65 = vmatprep.subr.bf16.mxu0 0
    %66 = vmatpush2.bf16.msra.mxu0 0
    %67 = vmatprep.subr.bf16.mxu0 0
    %68 = vmatpush2.bf16.msra.mxu0 0
    %69 = vmatprep.subr.bf16.mxu0 0
    %70 = vmatpush2.bf16.msra.mxu0 0
    %71 = vmatprep.subr.bf16.mxu0 0
    %72 = vmatpush2.bf16.msra.mxu0 0
    %73 = vmatprep.subr.bf16.mxu0 0
    %74 = vmatpush2.bf16.msra.mxu0 0
    %75 = vmatprep.subr.bf16.mxu0 0
    %76 = vmatpush2.bf16.msra.mxu0 0
    %77 = vmatprep.subr.bf16.mxu0 0
    %78 = vmatpush2.bf16.msra.mxu0 0
    %79 = vmatprep.subr.bf16.mxu0 0
    %80 = vmatpush2.bf16.msra.mxu0 0
    %81 = vmatprep.mubr.bf16.mxu0 0
    %82 = vmatmul.mubr.bf16.gmra.mxu0 %v47
    %v83 = vpop.f32.mrf.mxu0
    %v84 = vadd.f32 %v43, %v83
    %v85 = vpop.f32.mrf.mxu0
    %v86 = vpop.f32.mrf.mxu0
    %v87 = vpop.f32.mrf.mxu0
    %88 = vdwg.mxu0
    %v89 = vmul.f32 %v84, 0.2
    %v90 = vmax.f32 %v84, %v89
    %v91 = vld [vmem:[%s3] sm:$0xff]
    %v92 = vld [vmem:[%s3 + $0x8] sm:$0xff]
    %v93 = vld [vmem:[%s3 + $0x10] sm:$0xff]
    %v94 = vld [vmem:[%s3 + $0x18] sm:$0xff]
    %v95 = vld [vmem:[%s3 + $0x20] sm:$0xff]
    %v96 = vld [vmem:[%s3 + $0x28] sm:$0xff]
    %v97 = vld [vmem:[%s3 + $0x30] sm:$0xff]
    %v98 = vld [vmem:[%s3 + $0x38] sm:$0xff]
    %v99 = vld [vmem:[%s4] sm:$0x1]
    %v100 = vpack.c.bf16 %v90, %v90
    %v101 = vpack.c.bf16 %v92, %v91
    %v102 = vpack.c.bf16 %v94, %v93
    %v103 = vpack.c.bf16 %v96, %v95
    %v104 = vpack.c.bf16 %v98, %v97
    %v106 = vlaneseq
    %v107 = vshrl.u32 %v106, 7
    %v108 = vsub.s32 0, %v107
    %v109 = vrot.slane %v99, %v108
    %vm111 = vcmask 523264
    %v113 = vsel %vm111, %v100, 0
    %115 = vmatprep.subr.bf16.mxu0 0
    %116 = vmatpush1.bf16.msra.mxu0 0
    %117 = vmatprep.subr.bf16.mxu0 0
    %118 = vmatpush1.bf16.msra.mxu0 0
    %119 = vmatprep.subr.bf16.mxu0 0
    %120 = vmatpush1.bf16.msra.mxu0 0
    %121 = vmatprep.subr.bf16.mxu0 0
    %122 = vmatpush1.bf16.msra.mxu0 0
    %123 = vmatprep.subr.bf16.mxu0 0
    %124 = vmatpush1.bf16.msra.mxu0 %v104
    %125 = vmatprep.subr.bf16.mxu0 0
    %126 = vmatpush1.bf16.msra.mxu0 %v103
    %127 = vmatprep.subr.bf16.mxu0 0
    %128 = vmatpush1.bf16.msra.mxu0 %v102
    %129 = vmatprep.subr.bf16.mxu0 0
    %130 = vmatpush1.bf16.msra.mxu0 %v101
    %131 = vmatprep.subr.bf16.mxu0 0
    %132 = vmatpush2.bf16.msra.mxu0 0
    %133 = vmatprep.subr.bf16.mxu0 0
    %134 = vmatpush2.bf16.msra.mxu0 0
    %135 = vmatprep.subr.bf16.mxu0 0
    %136 = vmatpush2.bf16.msra.mxu0 0
    %137 = vmatprep.subr.bf16.mxu0 0
    %138 = vmatpush2.bf16.msra.mxu0 0
    %139 = vmatprep.subr.bf16.mxu0 0
    %140 = vmatpush2.bf16.msra.mxu0 0
    %141 = vmatprep.subr.bf16.mxu0 0
    %142 = vmatpush2.bf16.msra.mxu0 0
    %143 = vmatprep.subr.bf16.mxu0 0
    %144 = vmatpush2.bf16.msra.mxu0 0
    %145 = vmatprep.subr.bf16.mxu0 0
    %146 = vmatpush2.bf16.msra.mxu0 0
    %147 = vmatprep.mubr.bf16.mxu0 0
    %148 = vmatmul.mubr.bf16.gmra.mxu0 %v113
    %v149 = vpop.f32.mrf.mxu0
    %v150 = vadd.f32 %v109, %v149
    %v151 = vpop.f32.mrf.mxu0
    %v152 = vpop.f32.mrf.mxu0
    %v153 = vpop.f32.mrf.mxu0
    %154 = vdwg.mxu0
    %v155 = vmul.f32 %v150, 0.2
    %v156 = vmax.f32 %v150, %v155
    %v157 = vld [vmem:[%s5] sm:$0x1]
    %v158 = vld [vmem:[#allocation2] sm:$0x1]
    %160 = vset.pattern.permute.xlu0 0
    %161 = vperm.xlu0 %160, %v158
    %v162 = vpop.permute.xlu0 %161
    %v164 = vlaneseq
    %v165 = vshrl.u32 %v164, 7
    %v166 = vsub.s32 0, %v165
    %v167 = vrot.slane %v162, %v166
    %v169 = vsel %vm45, %v157, 0
    %v172 = vsel %vm45, %v156, 0
    %174 = vmatprep.subr.mxu0 0.0
    %175 = vmatpush1.xpose.msra.mxu0 0.0
    %176 = vmatprep.subr.mxu0 0.0
    %177 = vmatpush1.xpose.msra.mxu0 0.0
    %178 = vmatprep.subr.mxu0 0.0
    %179 = vmatpush1.xpose.msra.mxu0 0.0
    %180 = vmatprep.subr.mxu0 0.0
    %181 = vmatpush1.xpose.msra.mxu0 0.0
    %182 = vmatprep.subr.mxu0 0.0
    %183 = vmatpush1.xpose.msra.mxu0 0.0
    %184 = vmatprep.subr.mxu0 0.0
    %185 = vmatpush1.xpose.msra.mxu0 0.0
    %186 = vmatprep.subr.mxu0 0.0
    %187 = vmatpush1.xpose.msra.mxu0 0.0
    %188 = vmatprep.subr.mxu0 0.0
    %189 = vmatpush1.xpose.msra.mxu0 0.0
    %190 = vmatprep.subr.mxu0 0.0
    %191 = vmatpush1.xpose.msra.mxu0 0.0
    %192 = vmatprep.subr.mxu0 0.0
    %193 = vmatpush1.xpose.msra.mxu0 0.0
    %194 = vmatprep.subr.mxu0 0.0
    %195 = vmatpush1.xpose.msra.mxu0 0.0
    %196 = vmatprep.subr.mxu0 0.0
    %197 = vmatpush1.xpose.msra.mxu0 0.0
    %198 = vmatprep.subr.mxu0 0.0
    %199 = vmatpush1.xpose.msra.mxu0 0.0
    %200 = vmatprep.subr.mxu0 0.0
    %201 = vmatpush1.xpose.msra.mxu0 0.0
    %202 = vmatprep.subr.mxu0 0.0
    %203 = vmatpush1.xpose.msra.mxu0 0.0
    %204 = vmatprep.subr.mxu0 0.0
    %205 = vmatpush1.xpose.msra.mxu0 %v172
    %206 = vmatprep.subr.mxu0 0.0
    %207 = vmatpush2.xpose.msra.mxu0 0.0
    %208 = vmatprep.subr.mxu0 0.0
    %209 = vmatpush2.xpose.msra.mxu0 0.0
    %210 = vmatprep.subr.mxu0 0.0
    %211 = vmatpush2.xpose.msra.mxu0 0.0
    %212 = vmatprep.subr.mxu0 0.0
    %213 = vmatpush2.xpose.msra.mxu0 0.0
    %214 = vmatprep.subr.mxu0 0.0
    %215 = vmatpush2.xpose.msra.mxu0 0.0
    %216 = vmatprep.subr.mxu0 0.0
    %217 = vmatpush2.xpose.msra.mxu0 0.0
    %218 = vmatprep.subr.mxu0 0.0
    %219 = vmatpush2.xpose.msra.mxu0 0.0
    %220 = vmatprep.subr.mxu0 0.0
    %221 = vmatpush2.xpose.msra.mxu0 0.0
    %222 = vmatprep.subr.mxu0 0.0
    %223 = vmatpush2.xpose.msra.mxu0 0.0
    %224 = vmatprep.subr.mxu0 0.0
    %225 = vmatpush2.xpose.msra.mxu0 0.0
    %226 = vmatprep.subr.mxu0 0.0
    %227 = vmatpush2.xpose.msra.mxu0 0.0
    %228 = vmatprep.subr.mxu0 0.0
    %229 = vmatpush2.xpose.msra.mxu0 0.0
    %230 = vmatprep.subr.mxu0 0.0
    %231 = vmatpush2.xpose.msra.mxu0 0.0
    %232 = vmatprep.subr.mxu0 0.0
    %233 = vmatpush2.xpose.msra.mxu0 0.0
    %234 = vmatprep.subr.mxu0 0.0
    %235 = vmatpush2.xpose.msra.mxu0 0.0
    %236 = vmatprep.subr.mxu0 0.0
    %237 = vmatpush2.xpose.msra.mxu0 0.0
    %238 = vmatprep.mubr.f32.mxu0 0.0
    %239 = vmatmul.mubr.f32.gmra.mxu0 %v169
    %v240 = vpop.f32.mrf.mxu0
    %v241 = vadd.f32 %v167, %v240
    %v242 = vpop.f32.mrf.mxu0
    %243 = vdwg.mxu0
    %vm244 = vcmask 57344
    %245 = vst.msk [vmem:[#allocation3] sm:$0x1] %vm244, %v241
    // Predicated region
    $region30: #{tpu_custom_call.1} parent=1 // pred_check
      _
    $region31: #{tpu_custom_call.1} parent=1 // pred_check_branch
      %247 = sbr.rel (0) target = $region33
    $region32: #{tpu_custom_call.1} parent=1 // pred_region
      %s249 = ssub.s32 16, 16
      %250 = vsyncadd [#allocation4], %s249
      %s252 = sshll.u32 [#allocation3], 4
      %s253 = int_to_ptr.vmem [resolvable:$true] %s252
      %255 = dma.vmem_to_hbm [thread:$0]  %s253, 16, %s7, [#allocation4]
    $region33: #{tpu_custom_call.1} parent=1 // pred_fallthru
      _
    // Predicated region
    $region34: #{tpu_custom_call.1} parent=1 // pred_check
      _
    $region35: #{tpu_custom_call.1} parent=1 // pred_check_branch
      %257 = sbr.rel (0) target = $region37
    $region36: #{tpu_custom_call.1} parent=1 // pred_region
      %258 = dma.done [#allocation4], 16
    $region37: #{tpu_custom_call.1} parent=1 // pred_fallthru
      _
    %259 = vsyncpa [#allocation4], 1

</llo_original>
